<compile_context>
chip_gen: v7x
topology: tpu7x:2x2x1
jax: 0.10.0
libtpu: 0.0.40
codegen_flags: <defaults>
</compile_context>

<pallas_src>
import functools

import jax
import jax.numpy as jnp
from jax.experimental import pallas as pl
from jax.experimental.pallas import tpu as pltpu


def _round_up(x, m):
    return ((x + m - 1) // m) * m


def pg_forward_kernel(obs_ref, w1_ref, b1_ref, w2_ref, b2_ref, out_ref,
                      *, matmul_dtype, stable_softmax):
    obs = obs_ref[...]
    if matmul_dtype is not None:
        # In-kernel cast: single f32 HBM read of obs, single-pass bf16 MXU matmul.
        obs = obs.astype(matmul_dtype)

    # --- linear1: (TB, S) @ (S, H) + (1, H), f32 accumulation on the MXU ---
    h = jnp.dot(obs, w1_ref[...], preferred_element_type=jnp.float32)
    h = h + b1_ref[...]

    # --- tanh (f32 EUP; safe on v5e which lacks bf16 EUP/VPU) ---
    h = jnp.tanh(h)
    if matmul_dtype is not None:
        h = h.astype(matmul_dtype)

    # --- linear2: (TB, H) @ (H, A) + (1, A) ---
    logits = jnp.dot(h, w2_ref[...], preferred_element_type=jnp.float32)
    logits = logits + b2_ref[...]

    # --- softmax over last dim (matches F.softmax dim=1 for 2-D input) ---
    if stable_softmax:
        logits = logits - jnp.max(logits, axis=-1, keepdims=True)
    e = jnp.exp(logits)
    denom = jnp.sum(e, axis=-1, keepdims=True)
    # Exact divide (NOT approx reciprocal): rows sum to 1 to f32 precision.
    out_ref[...] = (e / denom).astype(out_ref.dtype)


def pg_torch_model_forward(obs, w1, b1, w2, b2, *, block_b=4096,
                           matmul_dtype=jnp.bfloat16, stable_softmax=True):
    """Pallas implementation of PGTorchModel.forward.

    obs: (B, state_dim) float32
    w1:  (state_dim, hid) float32   (hid = 10 * act_dim)
    b1:  (1, hid) float32
    w2:  (hid, act_dim) float32
    b2:  (1, act_dim) float32
    block_b:        batch tile (rows per grid step); 4096-8192 amortizes the
                    per-grid-step pipeline overhead for large rollout batches.
    matmul_dtype:   dtype used for the MXU operands (cast in-kernel for obs,
                    once in the wrapper for tiny W1/W2); None -> pure f32.
    stable_softmax: keep the max-subtraction (exact F.softmax semantics); can
                    be False on v5e where logits are provably bounded.
    returns: (B, act_dim) float32 softmax probabilities
    """
    B, S = obs.shape
    H = w1.shape[1]
    A = w2.shape[1]
    assert w1.shape == (S, H) and b1.shape == (1, H)
    assert w2.shape == (H, A) and b2.shape == (1, A)

    if matmul_dtype is not None:
        w1 = w1.astype(matmul_dtype)   # tiny one-time casts; obs stays f32 in HBM
        w2 = w2.astype(matmul_dtype)

    # Batch tile: multiple of 8 sublanes, capped at 8192 (v7x 64 MiB VMEM with
    # lane-padded blocks); small batches collapse to one full-array block.
    block_b = min(max(8, _round_up(block_b, 8)), 8192)
    tb = min(block_b, _round_up(B, 8))
    if tb >= B:
        tb = B                      # single block == full array dims (always legal)
    grid_b = pl.cdiv(B, tb)         # ragged last block: output rows masked on store

    kernel = functools.partial(pg_forward_kernel,
                               matmul_dtype=matmul_dtype,
                               stable_softmax=stable_softmax)

    out = pl.pallas_call(
        kernel,
        out_shape=jax.ShapeDtypeStruct((B, A), jnp.float32),
        grid=(grid_b,),
        in_specs=[
            pl.BlockSpec((tb, S), lambda i: (i, 0)),   # obs: tiled over batch
            pl.BlockSpec((S, H), lambda i: (0, 0)),    # W1: VMEM-resident
            pl.BlockSpec((1, H), lambda i: (0, 0)),    # b1: VMEM-resident
            pl.BlockSpec((H, A), lambda i: (0, 0)),    # W2: VMEM-resident
            pl.BlockSpec((1, A), lambda i: (0, 0)),    # b2: VMEM-resident
        ],
        out_specs=pl.BlockSpec((tb, A), lambda i: (i, 0)),
        compiler_params=pltpu.CompilerParams(
            dimension_semantics=("parallel",)),  # v7x: shard batch over 2 TCs
    )(obs, w1, b1, w2, b2)
    return out


def init_params(key, state_dim, act_dim):
    """Deterministic synthetic parameter init (shapes from PGTorchModel.__init__)."""
    hid = 10 * act_dim
    k1, k2, k3, k4 = jax.random.split(key, 4)
    lim1 = 1.0 / jnp.sqrt(jnp.float32(state_dim))
    lim2 = 1.0 / jnp.sqrt(jnp.float32(hid))
    w1 = jax.random.uniform(k1, (state_dim, hid), jnp.float32, -lim1, lim1)
    b1 = jax.random.uniform(k2, (1, hid), jnp.float32, -lim1, lim1)
    w2 = jax.random.uniform(k3, (hid, act_dim), jnp.float32, -lim2, lim2)
    b2 = jax.random.uniform(k4, (1, act_dim), jnp.float32, -lim2, lim2)
    return w1, b1, w2, b2


def reference_forward(obs, w1, b1, w2, b2):
    h = jnp.tanh(obs @ w1 + b1)
    logits = h @ w2 + b2
    return jax.nn.softmax(logits, axis=-1)


if __name__ == "__main__":
    key = jax.random.PRNGKey(0)
    k_obs, k_params, k_obs2, k_obs3 = jax.random.split(key, 4)

    state_dim = 32
    act_dim = 4  # hid1_size = 40
    w1, b1, w2, b2 = init_params(k_params, state_dim, act_dim)

    # --- Test 1: small batch, single tile, default bf16 matmul path ---
    obs = jax.random.normal(k_obs, (8, state_dim), jnp.float32)
    out = jax.block_until_ready(pg_torch_model_forward(obs, w1, b1, w2, b2))
    ref = reference_forward(obs, w1, b1, w2, b2)
    assert out.shape == (8, act_dim)
    assert jnp.allclose(out, ref, atol=2e-2, rtol=2e-2)
    # Exact divide -> rows sum to 1 to f32 precision regardless of matmul dtype.
    assert jnp.allclose(jnp.sum(out, axis=-1), jnp.ones((8,)), atol=1e-5)

    # --- Test 2: full-precision path, tight tolerance ---
    out_f32 = jax.block_until_ready(
        pg_torch_model_forward(obs, w1, b1, w2, b2, matmul_dtype=None))
    assert jnp.allclose(out_f32, ref, atol=1e-3, rtol=1e-3)
    assert jnp.allclose(jnp.sum(out_f32, axis=-1), jnp.ones((8,)), atol=1e-5)

    # --- Test 3: batch not a multiple of the tile -> ragged last block, no pad ---
    obs2 = jax.random.normal(k_obs2, (20, state_dim), jnp.float32)
    out2 = jax.block_until_ready(
        pg_torch_model_forward(obs2, w1, b1, w2, b2, block_b=8))
    ref2 = reference_forward(obs2, w1, b1, w2, b2)
    assert out2.shape == (20, act_dim)
    assert jnp.allclose(out2, ref2, atol=2e-2, rtol=2e-2)
    assert jnp.allclose(jnp.sum(out2, axis=-1), jnp.ones((20,)), atol=1e-5)

    # --- Test 4: tiny batch (B < 8) -> single full-array block path ---
    obs3 = jax.random.normal(k_obs3, (2, state_dim), jnp.float32)
    out3 = jax.block_until_ready(pg_torch_model_forward(obs3, w1, b1, w2, b2))
    ref3 = reference_forward(obs3, w1, b1, w2, b2)
    assert out3.shape == (2, act_dim)
    assert jnp.allclose(out3, ref3, atol=2e-2, rtol=2e-2)
    assert jnp.allclose(jnp.sum(out3, axis=-1), jnp.ones((2,)), atol=1e-5)

    print("KERNEL_OK")
</pallas_src>

<mosaic_0001>
module attributes {stable_mosaic.version = 11 : i64} {
  func.func @pg_forward_kernel(%arg0: i32, %arg1: memref<8x32xf32, #tpu.memory_space<vmem>>, %arg2: memref<32x40xbf16, #tpu.memory_space<vmem>>, %arg3: memref<1x40xf32, #tpu.memory_space<vmem>>, %arg4: memref<40x4xbf16, #tpu.memory_space<vmem>>, %arg5: memref<1x4xf32, #tpu.memory_space<vmem>>, %arg6: memref<8x4xf32, #tpu.memory_space<vmem>>) attributes {dimension_semantics = [#tpu.dimension_semantics<parallel>], iteration_bounds = array<i64: 1>, scalar_prefetch = 0 : i64, scratch_operands = 0 : i64, tpu.core_type = #tpu.core_type<tc>, window_params = [{transform_indices = @transform_0, window_bounds = array<i64: 8, 32>}, {pipeline_mode = #tpu.pipeline_mode<synchronous>, transform_indices = @transform_1, window_bounds = array<i64: 32, 40>}, {pipeline_mode = #tpu.pipeline_mode<synchronous>, transform_indices = @transform_2, window_bounds = array<i64: 1, 40>}, {pipeline_mode = #tpu.pipeline_mode<synchronous>, transform_indices = @transform_3, window_bounds = array<i64: 40, 4>}, {pipeline_mode = #tpu.pipeline_mode<synchronous>, transform_indices = @transform_4, window_bounds = array<i64: 1, 4>}, {transform_indices = @transform_5, window_bounds = array<i64: 8, 4>}]} {
    %c0 = arith.constant 0 : index
    %c0_0 = arith.constant 0 : index
    %0 = vector.load %arg1[%c0, %c0_0] : memref<8x32xf32, #tpu.memory_space<vmem>>, vector<8x32xf32>
    %1 = arith.truncf %0 : vector<8x32xf32> to vector<8x32xbf16>
    %c0_1 = arith.constant 0 : index
    %c0_2 = arith.constant 0 : index
    %2 = vector.load %arg2[%c0_1, %c0_2] : memref<32x40xbf16, #tpu.memory_space<vmem>>, vector<32x40xbf16>
    %cst = arith.constant dense<0.000000e+00> : vector<8x40xf32>
    %3 = tpu.matmul %1, %2, %cst {dimension_numbers = #tpu.dot_dimension_numbers<[1], [0], [0], [1], [0, 0, 1, 1], [], []>} : vector<8x32xbf16>, vector<32x40xbf16>, vector<8x40xf32> -> vector<8x40xf32>
    %c0_3 = arith.constant 0 : index
    %c0_4 = arith.constant 0 : index
    %4 = vector.load %arg3[%c0_3, %c0_4] : memref<1x40xf32, #tpu.memory_space<vmem>>, vector<1x40xf32>
    %5 = vector.broadcast %4 : vector<1x40xf32> to vector<8x40xf32>
    %6 = arith.addf %3, %5 : vector<8x40xf32>
    %7 = math.tanh %6 : vector<8x40xf32>
    %8 = arith.truncf %7 : vector<8x40xf32> to vector<8x40xbf16>
    %c0_5 = arith.constant 0 : index
    %c0_6 = arith.constant 0 : index
    %9 = vector.load %arg4[%c0_5, %c0_6] : memref<40x4xbf16, #tpu.memory_space<vmem>>, vector<40x4xbf16>
    %cst_7 = arith.constant dense<0.000000e+00> : vector<8x4xf32>
    %10 = tpu.matmul %8, %9, %cst_7 {dimension_numbers = #tpu.dot_dimension_numbers<[1], [0], [0], [1], [0, 0, 1, 1], [], []>} : vector<8x40xbf16>, vector<40x4xbf16>, vector<8x4xf32> -> vector<8x4xf32>
    %c0_8 = arith.constant 0 : index
    %c0_9 = arith.constant 0 : index
    %11 = vector.load %arg5[%c0_8, %c0_9] : memref<1x4xf32, #tpu.memory_space<vmem>>, vector<1x4xf32>
    %12 = vector.broadcast %11 : vector<1x4xf32> to vector<8x4xf32>
    %13 = arith.addf %10, %12 : vector<8x4xf32>
    %cst_10 = arith.constant dense<0xFF800000> : vector<8xf32>
    %14 = vector.multi_reduction <maximumf>, %13, %cst_10 [1] : vector<8x4xf32> to vector<8xf32>
    %15 = vector.shape_cast %14 : vector<8xf32> to vector<8x1xf32>
    %16 = vector.broadcast %15 : vector<8x1xf32> to vector<8x4xf32>
    %17 = arith.subf %13, %16 : vector<8x4xf32>
    %18 = math.exp %17 : vector<8x4xf32>
    %cst_11 = arith.constant dense<0.000000e+00> : vector<8xf32>
    %19 = vector.multi_reduction <add>, %18, %cst_11 [1] : vector<8x4xf32> to vector<8xf32>
    %20 = vector.shape_cast %19 : vector<8xf32> to vector<8x1xf32>
    %21 = vector.broadcast %20 : vector<8x1xf32> to vector<8x4xf32>
    %22 = arith.divf %18, %21 : vector<8x4xf32>
    %c0_12 = arith.constant 0 : index
    %c0_13 = arith.constant 0 : index
    %23 = vector.load %arg6[%c0_12, %c0_13] : memref<8x4xf32, #tpu.memory_space<vmem>>, vector<8x4xf32>
    tpu.vector_store %arg6[%c0_12, %c0_13], %22 {strides = array<i32>} : memref<8x4xf32, #tpu.memory_space<vmem>>, vector<8x4xf32>,
    return
  }
  func.func @transform_0(%arg0: i32) -> (i32, i32) {
    %c0_i32 = arith.constant 0 : i32
    %c0_i32_0 = arith.constant 0 : i32
    return %arg0, %c0_i32 : i32, i32
  }
  func.func @transform_1(%arg0: i32) -> (i32, i32) {
    %c0_i32 = arith.constant 0 : i32
    %c0_i32_0 = arith.constant 0 : i32
    %c0_i32_1 = arith.constant 0 : i32
    return %c0_i32, %c0_i32_0 : i32, i32
  }
  func.func @transform_2(%arg0: i32) -> (i32, i32) {
    %c0_i32 = arith.constant 0 : i32
    %c0_i32_0 = arith.constant 0 : i32
    %c0_i32_1 = arith.constant 0 : i32
    return %c0_i32, %c0_i32_0 : i32, i32
  }
  func.func @transform_3(%arg0: i32) -> (i32, i32) {
    %c0_i32 = arith.constant 0 : i32
    %c0_i32_0 = arith.constant 0 : i32
    %c0_i32_1 = arith.constant 0 : i32
    return %c0_i32, %c0_i32_0 : i32, i32
  }
  func.func @transform_4(%arg0: i32) -> (i32, i32) {
    %c0_i32 = arith.constant 0 : i32
    %c0_i32_0 = arith.constant 0 : i32
    %c0_i32_1 = arith.constant 0 : i32
    return %c0_i32, %c0_i32_0 : i32, i32
  }
  func.func @transform_5(%arg0: i32) -> (i32, i32) {
    %c0_i32 = arith.constant 0 : i32
    %c0_i32_0 = arith.constant 0 : i32
    return %arg0, %c0_i32 : i32, i32
  }
}

</mosaic_0001>

<llo_original>
// kernel: tpu_custom_call.1
$region0: #{tpu_custom_call.1}
  #allocation0 [shape = 'u32[]', space=smem, size = 0x4, offset = 0x4, fixed_abs, tag = 'smem constant byte address 0x4 - core index']
  #allocation1 [shape = 'u32[144,128]{1,0:T(1,128)}', space=vmem, size = 0x12000, scoped, tag = 'internal scratch']
  %s0 = inlined_call_operand.vmem [shape: f32[8,32], index: 0, kind: input, shape index: {}]
  %s1 = inlined_call_operand.vmem [shape: bf16[32,40], index: 1, kind: input, shape index: {}]
  %s2 = inlined_call_operand.vmem [shape: f32[1,40], index: 2, kind: input, shape index: {}]
  %s3 = inlined_call_operand.vmem [shape: bf16[40,4], index: 3, kind: input, shape index: {}]
  %s4 = inlined_call_operand.vmem [shape: f32[1,4], index: 4, kind: input, shape index: {}]
  %s5 = inlined_call_operand.vmem [shape: f32[8,4], index: 5, kind: output, shape index: {}]
  %s6 = sld [smem:[#allocation0]]
  $region30: #{tpu_custom_call.1} parent=0
    _
  %s8 = ssub.s32 1, %s6
  %s9 = scalar_select 0, %s8, %s6
  // Predicated region
  $region2: #{tpu_custom_call.1} parent=0 // pred_check
    _
  $region3: #{tpu_custom_call.1} parent=0 // pred_check_branch
    %11 = sbr.rel (0) target = $region5
  $region4: #{tpu_custom_call.1} parent=0 // pred_region
    _
  $region5: #{tpu_custom_call.1} parent=0 // pred_fallthru
    _
  // Predicated region
  $region6: #{tpu_custom_call.1} parent=0 // pred_check
    _
  $region7: #{tpu_custom_call.1} parent=0 // pred_check_branch
    %13 = sbr.rel (0) target = $region9
  $region8: #{tpu_custom_call.1} parent=0 // pred_region
    _
  $region9: #{tpu_custom_call.1} parent=0 // pred_fallthru
    _
  // Predicated region
  $region10: #{tpu_custom_call.1} parent=0 // pred_check
    _
  $region11: #{tpu_custom_call.1} parent=0 // pred_check_branch
    %15 = sbr.rel (0) target = $region13
  $region12: #{tpu_custom_call.1} parent=0 // pred_region
    _
  $region13: #{tpu_custom_call.1} parent=0 // pred_fallthru
    _
  // Predicated region
  $region14: #{tpu_custom_call.1} parent=0 // pred_check
    _
  $region15: #{tpu_custom_call.1} parent=0 // pred_check_branch
    %17 = sbr.rel (0) target = $region17
  $region16: #{tpu_custom_call.1} parent=0 // pred_region
    _
  $region17: #{tpu_custom_call.1} parent=0 // pred_fallthru
    _
  // Predicated region
  $region18: #{tpu_custom_call.1} parent=0 // pred_check
    _
  $region19: #{tpu_custom_call.1} parent=0 // pred_check_branch
    %19 = sbr.rel (0) target = $region21
  $region20: #{tpu_custom_call.1} parent=0 // pred_region
    _
  $region21: #{tpu_custom_call.1} parent=0 // pred_fallthru
    _
  %v21 = vld [vmem:[%s0] sm:$0xff]
  %v22 = vpack.c.bf16 %v21, %v21
  %v23 = vld [vmem:[%s1] sm:$0xf]
  %v24 = vld [vmem:[%s1 + $0x4] sm:$0xf]
  %v25 = vld [vmem:[%s1 + $0x8] sm:$0xf]
  %v26 = vld [vmem:[%s1 + $0xc] sm:$0xf]
  %v27 = vld [vmem:[%s2] sm:$0x1]
  %v29 = vlaneseq
  %v30 = vshrl.u32 %v29, 7
  %v31 = vsub.s32 0, %v30
  %v32 = vrot.slane %v27, %v31
  %v38 = vunpack.c.l.b16 %v23
  %v39 = vunpack.c.l.b16 %v24
  %v40 = vunpack.c.l.b16 %v25
  %v41 = vunpack.c.l.b16 %v26
  %v42 = vpack.c.b16 %v39, %v38
  %v43 = vpack.c.b16 %v41, %v40
  %vm46 = vcmask 261120
  %v48 = vsel %vm46, %v22, 0
  %50 = vmatprep.subr.bf16.mxu0 0
  %51 = vmatpush1.bf16.msra.mxu0 %v42
  %52 = vmatprep.subr.bf16.mxu0 0
  %53 = vmatpush1.bf16.msra.mxu0 %v43
  %54 = vmatprep.subr.bf16.mxu0 0
  %55 = vmatpush1.bf16.msra.mxu0 0
  %56 = vmatprep.subr.bf16.mxu0 0
  %57 = vmatpush1.bf16.msra.mxu0 0
  %58 = vmatprep.subr.bf16.mxu0 0
  %59 = vmatpush1.bf16.msra.mxu0 0
  %60 = vmatprep.subr.bf16.mxu0 0
  %61 = vmatpush1.bf16.msra.mxu0 0
  %62 = vmatprep.subr.bf16.mxu0 0
  %63 = vmatpush1.bf16.msra.mxu0 0
  %64 = vmatprep.subr.bf16.mxu0 0
  %65 = vmatpush1.bf16.msra.mxu0 0
  %66 = vmatprep.subr.bf16.mxu0 0
  %67 = vmatpush1.bf16.msra.mxu0 0
  %68 = vmatprep.subr.bf16.mxu0 0
  %69 = vmatpush1.bf16.msra.mxu0 0
  %70 = vmatprep.subr.bf16.mxu0 0
  %71 = vmatpush1.bf16.msra.mxu0 0
  %72 = vmatprep.subr.bf16.mxu0 0
  %73 = vmatpush1.bf16.msra.mxu0 0
  %74 = vmatprep.subr.bf16.mxu0 0
  %75 = vmatpush1.bf16.msra.mxu0 0
  %76 = vmatprep.subr.bf16.mxu0 0
  %77 = vmatpush1.bf16.msra.mxu0 0
  %78 = vmatprep.subr.bf16.mxu0 0
  %79 = vmatpush1.bf16.msra.mxu0 0
  %80 = vmatprep.subr.bf16.mxu0 0
  %81 = vmatpush1.bf16.msra.mxu0 0
  %82 = vmatprep.mubr.bf16.mxu0 0
  %83 = vmatmul.mubr.bf16.gmra.mrb[0].mxu0 %v48
  %v84 = vpop.f32.mrb[0].mxu0
  %v85 = vadd.f32 %v32, %v84
  %v86 = vpop.f32.mrb[0].mxu0
  %v87 = vpop.f32.mrb[0].mxu0
  %v88 = vpop.f32.mrb[0].mxu0
  %89 = vdwg.mxu0
  %v90 = vtanh.pop %v85
  %v91 = vpack.c.bf16 %v90, %v90
  %v92 = vld [vmem:[%s3] sm:$0xf]
  %v93 = vld [vmem:[%s3 + $0x4] sm:$0xf]
  %v94 = vld [vmem:[%s3 + $0x8] sm:$0xf]
  %v95 = vld [vmem:[%s3 + $0xc] sm:$0xf]
  %v96 = vld [vmem:[%s3 + $0x10] sm:$0xf]
  %v97 = vld [vmem:[%s4] sm:$0x1]
  %v99 = vlaneseq
  %v100 = vshrl.u32 %v99, 7
  %v101 = vsub.s32 0, %v100
  %v102 = vrot.slane %v97, %v101
  %v109 = vunpack.c.l.b16 %v92
  %v110 = vunpack.c.l.b16 %v93
  %v111 = vunpack.c.l.b16 %v94
  %v112 = vunpack.c.l.b16 %v95
  %v113 = vunpack.c.l.b16 %v96
  %v114 = vpack.c.b16 %v110, %v109
  %v115 = vpack.c.b16 %v112, %v111
  %v116 = vpack.c.b16 %v113, %v113
  %vm119 = vcmask 326656
  %v121 = vsel %vm119, %v91, 0
  %vm123 = vcmask 1043456
  %v125 = vsel %vm123, %v116, 0
  %127 = vmatprep.subr.bf16.mxu0 0
  %128 = vmatpush1.bf16.msra.mxu0 %v114
  %129 = vmatprep.subr.bf16.mxu0 0
  %130 = vmatpush1.bf16.msra.mxu0 %v115
  %131 = vmatprep.subr.bf16.mxu0 0
  %132 = vmatpush1.bf16.msra.mxu0 %v125
  %133 = vmatprep.subr.bf16.mxu0 0
  %134 = vmatpush1.bf16.msra.mxu0 0
  %135 = vmatprep.subr.bf16.mxu0 0
  %136 = vmatpush1.bf16.msra.mxu0 0
  %137 = vmatprep.subr.bf16.mxu0 0
  %138 = vmatpush1.bf16.msra.mxu0 0
  %139 = vmatprep.subr.bf16.mxu0 0
  %140 = vmatpush1.bf16.msra.mxu0 0
  %141 = vmatprep.subr.bf16.mxu0 0
  %142 = vmatpush1.bf16.msra.mxu0 0
  %143 = vmatprep.subr.bf16.mxu0 0
  %144 = vmatpush1.bf16.msra.mxu0 0
  %145 = vmatprep.subr.bf16.mxu0 0
  %146 = vmatpush1.bf16.msra.mxu0 0
  %147 = vmatprep.subr.bf16.mxu0 0
  %148 = vmatpush1.bf16.msra.mxu0 0
  %149 = vmatprep.subr.bf16.mxu0 0
  %150 = vmatpush1.bf16.msra.mxu0 0
  %151 = vmatprep.subr.bf16.mxu0 0
  %152 = vmatpush1.bf16.msra.mxu0 0
  %153 = vmatprep.subr.bf16.mxu0 0
  %154 = vmatpush1.bf16.msra.mxu0 0
  %155 = vmatprep.subr.bf16.mxu0 0
  %156 = vmatpush1.bf16.msra.mxu0 0
  %157 = vmatprep.subr.bf16.mxu0 0
  %158 = vmatpush1.bf16.msra.mxu0 0
  %159 = vmatprep.mubr.bf16.mxu0 0
  %160 = vmatmul.mubr.bf16.gmra.mrb[0].mxu0 %v121
  %v161 = vpop.f32.mrb[0].mxu0
  %v162 = vadd.f32 %v102, %v161
  %v163 = vpop.f32.mrb[0].mxu0
  %v164 = vpop.f32.mrb[0].mxu0
  %v165 = vpop.f32.mrb[0].mxu0
  %166 = vdwg.mxu0
  %vm167 = vcmask 31744
  %v168 = vsel %vm167, %v162, -inf
  %169 = vmax.xlane.f32.xlu0 %v168
  %v170 = vpop.xlane.xlu0 %169
  %v171 = vsub.f32 %v162, %v170
  %v172 = vmul.f32 %v171, 1.442695
  %v173 = vpow.pop %v172
  %v174 = vsel %vm167, %v173, 0.0
  %175 = vadd.xlane.f32.xlu0 %v174
  %v176 = vpop.xlane.xlu0 %175
  %v177 = vrcp.pop %v176
  %v178 = vmul.f32 %v173, %v177
  %179 = vst.msk [vmem:[%s5] sm:$0xff] %vm167, %v178
  // Predicated region
  $region22: #{tpu_custom_call.1} parent=0 // pred_check
    _
  $region23: #{tpu_custom_call.1} parent=0 // pred_check_branch
    %181 = sbr.rel (0) target = $region25
  $region24: #{tpu_custom_call.1} parent=0 // pred_region
    _
  $region25: #{tpu_custom_call.1} parent=0 // pred_fallthru
    _
  // Predicated region
  $region26: #{tpu_custom_call.1} parent=0 // pred_check
    _
  $region27: #{tpu_custom_call.1} parent=0 // pred_check_branch
    %183 = sbr.rel (0) target = $region29
  $region28: #{tpu_custom_call.1} parent=0 // pred_region
    _
  $region29: #{tpu_custom_call.1} parent=0 // pred_fallthru
    _

</llo_original>
